<compile_context>
chip_gen: v7x
topology: tpu7x:2x2x1
jax: 0.10.0
libtpu: 0.0.40
codegen_flags: <defaults>
</compile_context>

<pallas_src>
import functools
import math

import jax
import jax.numpy as jnp
from jax.experimental import pallas as pl
from jax.experimental.pallas import tpu as pltpu

_PLANE_TILE = 512  # target tile edge for the in-kernel H/W transpose


# ---------------------------------------------------------------------------
# Per-generation constants (tile byte target / VMEM limit / min grid steps).
# ---------------------------------------------------------------------------
def _chip_config():
    vmem = None
    try:
        info = pltpu.get_tpu_info()
        vmem = getattr(info, "vmem_capacity_bytes", None)
    except Exception:
        vmem = None
    if vmem is not None and vmem <= 96 * 1024 * 1024:
        # v7x-like: 64 MiB VMEM per TensorCore, 2 TCs, ~3.2 TB/s HBM.
        return {"tile_bytes": 4 * 1024 * 1024,
                "vmem_limit": 44 * 1024 * 1024,
                "min_grid": 2}
    if vmem is not None:
        # v5e / v6e: 128 MiB VMEM, 1 TC.
        return {"tile_bytes": 8 * 1024 * 1024,
                "vmem_limit": 64 * 1024 * 1024,
                "min_grid": 1}
    # Unknown backend (e.g. interpret mode): conservative settings that fit everywhere.
    return {"tile_bytes": 4 * 1024 * 1024,
            "vmem_limit": 40 * 1024 * 1024,
            "min_grid": 1}


# ---------------------------------------------------------------------------
# Small integer helpers.
# ---------------------------------------------------------------------------
def _largest_divisor(n, cap):
    cap = max(1, min(n, cap))
    for d in range(cap, 0, -1):
        if n % d == 0:
            return d
    return 1


def _largest_aligned_divisor(n, cap, align):
    """Largest divisor of n that is a multiple of `align` and <= cap, else None."""
    d = min(n, cap)
    d -= d % align
    while d >= align:
        if n % d == 0:
            return d
        d -= align
    return None


def _pick_tail2(tail_shape):
    """Reshape the (merged) trailing axes into a lane/sublane-dense 2-D tail."""
    m = math.prod(tail_shape)
    if m % 128 == 0:
        # Widest 128-multiple lane count that keeps >= 8 sublane rows when possible,
        # capped at 2048 lanes so the rows dim stays tileable for very large tails.
        cap = m // 8 if m >= 8 * 128 else 128
        cap = min(cap, 2048)
        lanes = _largest_aligned_divisor(m, cap, 128) or 128
        return (m // lanes, lanes)
    # Non-lane-aligned planes: keep the original last dim (full-dim blocks are legal).
    return (m // tail_shape[-1], tail_shape[-1])


def _pick_fold_axis(lead_shape, lead_perm, unit_bytes, tile_bytes, other_grid,
                    min_grid, prefer_out):
    """Pick one leading axis to fold into each block, and its block size."""
    lead = len(lead_shape)
    cap = max(1, tile_bytes // max(1, unit_bytes))
    j_max = max(range(lead), key=lambda i: (lead_shape[i], i))
    bj_max = _largest_divisor(lead_shape[j_max], cap)
    j, bj = j_max, bj_max
    if prefer_out:
        # Prefer the output-innermost leading axis (contiguous HBM writeback) unless
        # the largest-extent axis gives a much bigger block (far fewer steps).
        j_out = lead_perm[-1]
        bj_out = _largest_divisor(lead_shape[j_out], cap)
        if 4 * bj_out >= bj_max:
            j, bj = j_out, bj_out
    # On a 2-TensorCore part make sure the parallel grid has >= 2 steps.
    rest = other_grid * math.prod(lead_shape[:j] + lead_shape[j + 1:])
    if (min_grid >= 2 and rest == 1 and bj == lead_shape[j]
            and lead_shape[j] >= 2):
        bj = _largest_divisor(lead_shape[j], lead_shape[j] // 2)
    return j, bj


# ---------------------------------------------------------------------------
# Kernel bodies.
# ---------------------------------------------------------------------------
def _copy_kernel(x_ref, o_ref):
    o_ref[...] = x_ref[...]


def _copy_merge_kernel(x_ref, o_ref):
    # (bj, rows, lanes) -> (bj*rows, lanes); sublane-aligned collapse (rows % 8 == 0).
    o_ref[...] = jnp.reshape(x_ref[...], o_ref.shape)


def _swap_last_kernel(x_ref, o_ref, *, batched):
    x = x_ref[...]
    if batched:
        o_ref[...] = jnp.swapaxes(x, 1, 2)   # one batched minor-dims transpose
    else:
        o_ref[...] = jnp.swapaxes(x, 0, 1)


def _permute_call(kernel, x_in, out_struct, grid, in_block, out_block,
                  in_index_map, out_index_map, bytes_accessed, vmem_limit):
    return pl.pallas_call(
        kernel,
        out_shape=out_struct,
        grid_spec=pltpu.PrefetchScalarGridSpec(
            num_scalar_prefetch=0,
            grid=grid,
            in_specs=[pl.BlockSpec(in_block, in_index_map)],
            out_specs=pl.BlockSpec(out_block, out_index_map),
        ),
        compiler_params=pltpu.CompilerParams(
            dimension_semantics=("parallel",) * len(grid),
            vmem_limit_bytes=vmem_limit,
        ),
        cost_estimate=pl.CostEstimate(
            flops=0, transcendentals=0, bytes_accessed=bytes_accessed),
    )(x_in)


# ---------------------------------------------------------------------------
# No H/W swap: only the leading axes move; the tail is a contiguous unit.
# ---------------------------------------------------------------------------
def _permute_leading(x, lead_perm, out_shape, cfg):
    lead = len(lead_perm)
    lead_shape = x.shape[:lead]
    itemsize = x.dtype.itemsize
    rows, lanes = _pick_tail2(x.shape[lead:])
    x2 = x.reshape(lead_shape + (rows, lanes))

    # Tile the tail rows if a single tail plane exceeds the tile budget.
    row_bytes = lanes * itemsize
    if rows * row_bytes > cfg["tile_bytes"]:
        cap_rows = max(1, cfg["tile_bytes"] // row_bytes)
        tr = _largest_aligned_divisor(rows, cap_rows, 8) or rows
    else:
        tr = rows
    n_row_blocks = rows // tr

    j, bj = _pick_fold_axis(lead_shape, lead_perm, tr * row_bytes,
                            cfg["tile_bytes"], n_row_blocks, cfg["min_grid"],
                            prefer_out=True)
    grid = tuple(lead_shape[i] // bj if i == j else lead_shape[i]
                 for i in range(lead)) + (n_row_blocks,)

    in_block = tuple(bj if i == j else None for i in range(lead)) + (tr, lanes)

    def in_index_map(*g):
        return tuple(g[:lead]) + (g[lead], 0)

    merged = (j == lead_perm[-1]) and (tr == rows) and (rows % 8 == 0)

    if merged:
        # Fold the output-innermost leading axis into the output tail's row dim:
        # each step stores one contiguous lane-dense 2-D slab (single DMA, unmasked).
        out2_shape = tuple(lead_shape[lead_perm[q]] for q in range(lead - 1)) \
            + (lead_shape[j] * rows, lanes)
        out_block = (None,) * (lead - 1) + (bj * rows, lanes)

        def out_index_map(*g):
            return tuple(g[lead_perm[q]] for q in range(lead - 1)) + (g[j], 0)

        kernel = _copy_merge_kernel
    else:
        out2_shape = tuple(lead_shape[lead_perm[q]] for q in range(lead)) \
            + (rows, lanes)
        out_block = tuple(bj if lead_perm[q] == j else None
                          for q in range(lead)) + (tr, lanes)

        def out_index_map(*g):
            return tuple(g[lead_perm[q]] for q in range(lead)) + (g[lead], 0)

        kernel = _copy_kernel

    out2 = _permute_call(
        kernel, x2, jax.ShapeDtypeStruct(out2_shape, x.dtype), grid,
        in_block, out_block, in_index_map, out_index_map,
        2 * x.size * itemsize, cfg["vmem_limit"])
    return out2.reshape(out_shape)


# ---------------------------------------------------------------------------
# H/W swap: leading axes move via index_maps; (H, W) is tiled and transposed
# in-kernel, with the tile swap expressed in the output index_map.
# ---------------------------------------------------------------------------
def _permute_swap_last(x, lead_perm, out_shape, cfg):
    lead = len(lead_perm)
    lead_shape = x.shape[:lead]
    h, w = x.shape[-2], x.shape[-1]
    itemsize = x.dtype.itemsize

    # Legality for input (th, tw) + output (tw, th) blocks: each tile edge must be a
    # multiple of 128 or the full extent.
    th = _largest_aligned_divisor(h, _PLANE_TILE, 128) or h
    tw = _largest_aligned_divisor(w, _PLANE_TILE, 128) or w
    # TODO(synk): masked/padded tiling for huge planes that are not 128-aligned
    #             (they currently go in one full-plane block).
    plane_grid = (h // th, w // tw)
    plane_bytes = th * tw * itemsize

    if lead == 0:
        grid = plane_grid
        in_block = (th, tw)
        out_block = (tw, th)

        def in_index_map(hi, wi):
            return (hi, wi)

        def out_index_map(hi, wi):
            return (wi, hi)

        kernel = functools.partial(_swap_last_kernel, batched=False)
    else:
        prefer_out = (th == h and tw == w)  # whole planes -> contiguous output slabs
        j, bj = _pick_fold_axis(lead_shape, lead_perm, plane_bytes,
                                cfg["tile_bytes"],
                                plane_grid[0] * plane_grid[1],
                                cfg["min_grid"], prefer_out=prefer_out)
        grid = tuple(lead_shape[i] // bj if i == j else lead_shape[i]
                     for i in range(lead)) + plane_grid
        in_block = tuple(bj if i == j else None
                         for i in range(lead)) + (th, tw)
        out_block = tuple(bj if lead_perm[q] == j else None
                          for q in range(lead)) + (tw, th)

        def in_index_map(*g):
            return tuple(g[:lead]) + (g[lead], g[lead + 1])

        def out_index_map(*g):
            return tuple(g[lead_perm[q]] for q in range(lead)) \
                + (g[lead + 1], g[lead])

        kernel = functools.partial(_swap_last_kernel, batched=True)

    return _permute_call(
        kernel, x, jax.ShapeDtypeStruct(out_shape, x.dtype), grid,
        in_block, out_block, in_index_map, out_index_map,
        2 * x.size * itemsize, cfg["vmem_limit"])


# ---------------------------------------------------------------------------
# Public entry point.
# ---------------------------------------------------------------------------
def permute_pallas(x, ordering):
    """Permute the axes of `x` according to `ordering` using Pallas TPU kernels."""
    n = x.ndim
    ordering = tuple(int(o) % n for o in ordering)
    if sorted(ordering) != list(range(n)):
        raise ValueError("ordering must be a permutation of the axes")
    out_shape = tuple(x.shape[o] for o in ordering)

    if ordering == tuple(range(n)):
        return x  # identity permutation: no data movement needed

    if n < 2 or set(ordering[-2:]) != {n - 2, n - 1}:
        # TODO(synk): orderings that move the trailing spatial axes into leading
        # positions need a tiled cross-axis transpose kernel; fall back to XLA.
        return jnp.transpose(x, ordering)

    cfg = _chip_config()
    swap_last = ordering[-2] == n - 1
    lead = n - 2
    lead_perm = ordering[:lead]

    if swap_last:
        return _permute_swap_last(x, lead_perm, out_shape, cfg)

    # Merge trailing leading axes that stay in place into the tail so the contiguous
    # unit (and each DMA slab) is as large as possible.
    while lead > 0 and lead_perm[lead - 1] == lead - 1:
        lead -= 1
    return _permute_leading(x, lead_perm[:lead], out_shape, cfg)


class Permute:
    """JAX/Pallas equivalent of the PyTorch Permute module."""

    def __init__(self, ordering):
        self.ordering = tuple(ordering)

    def __call__(self, frames):
        return permute_pallas(frames, self.ordering)


if __name__ == "__main__":
    key = jax.random.PRNGKey(0)
    # frames in the default (C, T, H, W) ordering
    C, T, H, W = 4, 8, 16, 16
    x = jax.random.normal(key, (C, T, H, W), dtype=jnp.float32)

    # (C, T, H, W) -> (T, C, H, W)   [no-swap path]
    module = Permute((1, 0, 2, 3))
    out = jax.block_until_ready(module(x))
    expected = jnp.transpose(x, (1, 0, 2, 3))
    assert out.shape == expected.shape, (out.shape, expected.shape)
    assert out.dtype == expected.dtype
    assert bool(jnp.array_equal(out, expected))

    # (C, T, H, W) -> (T, C, W, H)   [H/W-swap path, batched in-kernel transpose]
    out2 = jax.block_until_ready(permute_pallas(x, (1, 0, 3, 2)))
    assert bool(jnp.array_equal(out2, jnp.transpose(x, (1, 0, 3, 2))))

    # 5-D with trailing-fixed-axis merge + merged 2-D output slab path
    y = jax.random.normal(key, (2, 3, 4, 16, 16), dtype=jnp.float32)
    out3 = jax.block_until_ready(permute_pallas(y, (1, 0, 2, 3, 4)))
    assert bool(jnp.array_equal(out3, jnp.transpose(y, (1, 0, 2, 3, 4))))

    print("KERNEL_OK")
</pallas_src>

<mosaic_0001>
module attributes {stable_mosaic.version = 11 : i64} {
  func.func @_copy_kernel(%arg0: i32, %arg1: i32, %arg2: i32, %arg3: memref<4x1x2x128xf32, #tpu.memory_space<vmem>>, %arg4: memref<1x4x2x128xf32, #tpu.memory_space<vmem>>) attributes {dimension_semantics = [#tpu.dimension_semantics<parallel>, #tpu.dimension_semantics<parallel>, #tpu.dimension_semantics<parallel>], iteration_bounds = array<i64: 1, 8, 1>, scalar_prefetch = 0 : i64, scratch_operands = 0 : i64, tpu.core_type = #tpu.core_type<tc>, window_params = [{transform_indices = @transform_0, window_bounds = array<i64: 4, 1, 2, 128>}, {transform_indices = @transform_1, window_bounds = array<i64: 1, 4, 2, 128>}]} {
    %c0 = arith.constant 0 : index
    %c0_0 = arith.constant 0 : index
    %c0_1 = arith.constant 0 : index
    %c0_2 = arith.constant 0 : index
    %0 = vector.load %arg3[%c0, %c0_0, %c0_1, %c0_2] : memref<4x1x2x128xf32, #tpu.memory_space<vmem>>, vector<4x1x2x128xf32>
    %1 = vector.shape_cast %0 : vector<4x1x2x128xf32> to vector<4x2x128xf32>
    %c0_3 = arith.constant 0 : index
    %c0_4 = arith.constant 0 : index
    %c0_5 = arith.constant 0 : index
    %c0_6 = arith.constant 0 : index
    %2 = vector.load %arg4[%c0_3, %c0_4, %c0_5, %c0_6] : memref<1x4x2x128xf32, #tpu.memory_space<vmem>>, vector<1x4x2x128xf32>
    %3 = vector.shape_cast %2 : vector<1x4x2x128xf32> to vector<4x2x128xf32>
    %4 = vector.shape_cast %1 : vector<4x2x128xf32> to vector<1x4x2x128xf32>
    tpu.vector_store %arg4[%c0_3, %c0_4, %c0_5, %c0_6], %4 {strides = array<i32>} : memref<1x4x2x128xf32, #tpu.memory_space<vmem>>, vector<1x4x2x128xf32>,
    return
  }
  func.func @transform_0(%arg0: i32, %arg1: i32, %arg2: i32) -> (i32, i32, i32, i32) {
    %c0_i32 = arith.constant 0 : i32
    %c0_i32_0 = arith.constant 0 : i32
    return %arg0, %arg1, %arg2, %c0_i32 : i32, i32, i32, i32
  }
  func.func @transform_1(%arg0: i32, %arg1: i32, %arg2: i32) -> (i32, i32, i32, i32) {
    %c0_i32 = arith.constant 0 : i32
    %c0_i32_0 = arith.constant 0 : i32
    return %arg1, %arg0, %arg2, %c0_i32 : i32, i32, i32, i32
  }
}

</mosaic_0001>

<llo_original>
// kernel: tpu_custom_call.1
$region0: #{tpu_custom_call.1}
  #allocation0 [shape = 'u32[]', space=smem, size = 0x4, offset = 0x4, fixed_abs, tag = 'smem constant byte address 0x4 - core index']
  #allocation1 [shape = 'u32[144,128]{1,0:T(1,128)}', space=vmem, size = 0x12000, scoped, tag = 'internal scratch']
  %s0 = inlined_call_operand.hbm [shape: f32[4,8,2,128], index: 0, kind: input, shape index: {}]
  %s1 = inlined_call_operand.hbm [shape: f32[8,4,2,128], index: 1, kind: output, shape index: {}]
  %s2 = sld [smem:[#allocation0]]
  $region41: #{tpu_custom_call.1} parent=0
    _
  %s4 = ssub.s32 1, %s2
  %s5 = scalar_select 0, %s4, %s2
  $region1: #{tpu_custom_call.1} parent=0
    #allocation2 [shape = 'u8[8192]{0}', space=vmem, size = 0x2000, scoped, tag = 'input window, operand 0']
    #allocation3 [shape = 's32[2]{0}', space=sflag, size = 0x8, scoped, tag = 'scoped memory for tpu_custom_call.1']
    #allocation4 [shape = 's32[2]{0}', space=sflag, size = 0x8, scoped, tag = 'scoped memory for tpu_custom_call.1']
    #allocation5 [shape = 'u8[8192]{0}', space=vmem, size = 0x2000, scoped, tag = 'output window, operand 0']
    %6 = vsyncpa [#allocation3], 0
    %s7 = scalar_lea.sflag [#allocation3], 1
    %8 = vsyncpa %s7, 0
    %9 = vsyncpa [#allocation4], 0
    %s10 = scalar_lea.sflag [#allocation4], 1
    %11 = vsyncpa %s10, 0
    loop: start=0, step=1, limit=10
    $region2: #{tpu_custom_call.1} parent=1 // loop_pre_header
      _
    $region3: #{tpu_custom_call.1} parent=1 // loop_header
      %s13 = sphi 0, %s17
      %p14 = scmp.ge.s32.totalorder %s13, 10
      %s20 = sphi 0, %s39
      %s21 = sphi 0, %s35
      %s22 = sphi 0, %s31
      %s23 = sphi 0, %s20
      %s24 = sphi 0, %s21
      %s25 = sphi 0, %s22
      %s26 = sphi 0, %s23
      %s27 = sphi 0, %s24
      %s28 = sphi 0, %s25
      %s46 = sphi 0, %s48
      %s49 = sphi 0, %s46
      %s50 = sphi 0, %s49
      %s66 = sphi 0, %s50
      %s76 = sphi 0, %s78
      %s79 = sphi 0, %s76
      %s80 = sphi 0, %s79
      %s96 = sphi 0, %s80
    $region4: #{tpu_custom_call.1} parent=1 // loop_header_branch
      %16 = sbr.rel (%p14) target = $region8
    $region5: #{tpu_custom_call.1} parent=1 // loop_body
      %s18 = ssub.s32 %s13, 1
      %s19 = ssub.s32 %s13, 2
      %s29 = sadd.s32 1, %s22
      %p30 = scmp.ge.s32.totalorder %s29, 1
      %s31 = scalar_select %p30, 0, %s29
      %s32 = sadd.s32 1, %s21
      %s33 = scalar_select %p30, %s32, %s21
      %p34 = scmp.ge.s32.totalorder %s33, 8
      %s35 = scalar_select %p34, 0, %s33
      %s36 = sadd.s32 1, %s20
      %s37 = scalar_select %p34, %s36, %s20
      %p38 = scmp.ge.s32.totalorder %s37, 1
      %s39 = scalar_select %p38, 0, %s37
      %s40 = ssub.s32 %s20, %s39
      %s41 = ssub.s32 %s21, %s35
      %s42 = sor.u32 %s40, %s41
      %s43 = ssub.s32 %s22, %s31
      %s44 = sor.u32 %s42, %s43
      %p45 = scmp.eq.s32.totalorder %s44, 0
      %s47 = sadd.s32 %s46, 1
      %s48 = scalar_select %p45, %s46, %s47
      %p51 = pneg %p45
      %p52 = scmp.eq.s32.totalorder %s13, 7
      %p53 = por %p51, %p52
      %p54 = scmp.ne.s32.totalorder %s46, %s49
      %p55 = scmp.eq.s32.totalorder %s13, 0
      %p56 = por %p54, %p55
      %p57 = scmp.ne.s32.totalorder %s46, %s49
      %p58 = scmp.eq.s32.totalorder %s18, 7
      %p59 = por %p57, %p58
      %p60 = scmp.ne.s32.totalorder %s49, %s50
      %p61 = scmp.eq.s32.totalorder %s18, 0
      %p62 = por %p60, %p61
      %p63 = scmp.ne.s32.totalorder %s49, %s50
      %p64 = scmp.eq.s32.totalorder %s19, 7
      %p65 = por %p63, %p64
      %p67 = scmp.ne.s32.totalorder %s50, %s66
      %p68 = scmp.eq.s32.totalorder %s19, 0
      %p69 = por %p67, %p68
      %s70 = ssub.s32 %s21, %s35
      %s71 = ssub.s32 %s20, %s39
      %s72 = sor.u32 %s70, %s71
      %s73 = ssub.s32 %s22, %s31
      %s74 = sor.u32 %s72, %s73
      %p75 = scmp.eq.s32.totalorder %s74, 0
      %s77 = sadd.s32 %s76, 1
      %s78 = scalar_select %p75, %s76, %s77
      %p81 = pneg %p75
      %p82 = scmp.eq.s32.totalorder %s13, 7
      %p83 = por %p81, %p82
      %p84 = scmp.ne.s32.totalorder %s76, %s79
      %p85 = scmp.eq.s32.totalorder %s13, 0
      %p86 = por %p84, %p85
      %p87 = scmp.ne.s32.totalorder %s76, %s79
      %p88 = scmp.eq.s32.totalorder %s18, 7
      %p89 = por %p87, %p88
      %p90 = scmp.ne.s32.totalorder %s79, %s80
      %p91 = scmp.eq.s32.totalorder %s18, 0
      %p92 = por %p90, %p91
      %p93 = scmp.ne.s32.totalorder %s79, %s80
      %p94 = scmp.eq.s32.totalorder %s19, 7
      %p95 = por %p93, %p94
      %p97 = scmp.ne.s32.totalorder %s80, %s96
      %p98 = scmp.eq.s32.totalorder %s19, 0
      %p99 = por %p97, %p98
      %p100 = scmp.le.s32.totalorder 1, %s13
      %p101 = scmp.lt.s32.totalorder %s13, 9
      %p102 = pnand %p100, %p101
      %p103 = pneg %p102
      // Predicated region
      $region9: #{tpu_custom_call.1} parent=5 // pred_check
        _
      $region10: #{tpu_custom_call.1} parent=5 // pred_check_branch
        %105 = sbr.rel (%p102) target = $region12
      $region11: #{tpu_custom_call.1} parent=5 // pred_region
        %s106 = ssub.s32 %s13, 1
      $region12: #{tpu_custom_call.1} parent=5 // pred_fallthru
        _
      %p107 = scmp.lt.s32.totalorder %s13, 8
      // Predicated region
      $region13: #{tpu_custom_call.1} parent=5 // pred_check
        %p108 = pneg %p107
      $region14: #{tpu_custom_call.1} parent=5 // pred_check_branch
        %110 = sbr.rel (%p108) target = $region16
      $region15: #{tpu_custom_call.1} parent=5 // pred_region
        // Predicated region
        $region17: #{tpu_custom_call.1} parent=15 // pred_check
          %p111 = pneg %p56
        $region18: #{tpu_custom_call.1} parent=15 // pred_check_branch
          %113 = sbr.rel (%p111) target = $region20
        $region19: #{tpu_custom_call.1} parent=15 // pred_region
          %s114 = sand.u32 %s46, 1
          %s115 = scalar_lea.sflag [#allocation3], %s114
          %s116 = sand.u32 %s46, 1
          %s117 = smul.addr %s116, 8
          %s118 = scalar_lea.vmem [#allocation2], %s117
          %s119 = smul.u32 4, %s20
          %s121 = ssub.s32 128, 128
          %122 = vsyncadd %s115, %s121
          %s123 = sadd.s32 %s22, %s21
          %s124 = smul.addr %s119, 8
          %s125 = sadd.s32 %s123, %s124
          %s126 = smul.addr %s125, 32
          %s127 = scalar_lea.hbm %s0, %s126
          %s128 = sshll.u32 %s118, 4
          %s129 = int_to_ptr.vmem [resolvable:$true] %s128
          %134 = dma.hbm_to_vmem [thread:$0]  %s127, 128, %s129, %s115, 256, 32, 2
        $region20: #{tpu_custom_call.1} parent=15 // pred_fallthru
          _
      $region16: #{tpu_custom_call.1} parent=5 // pred_fallthru
        _
      %p135 = scmp.le.s32.totalorder 1, %s13
      %p136 = scmp.lt.s32.totalorder %s13, 9
      %p137 = pnand %p135, %p136
      %p138 = pneg %p137
      // Predicated region
      $region21: #{tpu_custom_call.1} parent=5 // pred_check
        _
      $region22: #{tpu_custom_call.1} parent=5 // pred_check_branch
        %140 = sbr.rel (%p137) target = $region24
      $region23: #{tpu_custom_call.1} parent=5 // pred_region
        %s141 = ssub.s32 %s13, 1
        %s142 = sand.u32 %s49, 1
        %s143 = scalar_lea.sflag [#allocation3], %s142
        %s144 = sand.u32 %s49, 1
        %s145 = smul.addr %s144, 8
        %s146 = scalar_lea.vmem [#allocation2], %s145
        // Predicated region
        $region25: #{tpu_custom_call.1} parent=23 // pred_check
          %p147 = pneg %p62
        $region26: #{tpu_custom_call.1} parent=23 // pred_check_branch
          %149 = sbr.rel (%p147) target = $region28
        $region27: #{tpu_custom_call.1} parent=23 // pred_region
          %150 = dma.done %s143, 128
        $region28: #{tpu_custom_call.1} parent=23 // pred_fallthru
          _
        %s151 = sand.u32 %s49, 1
        %s152 = scalar_lea.sflag [#allocation3], %s151
        %s153 = sand.u32 %s49, 1
        %s154 = smul.addr %s153, 8
        %s155 = scalar_lea.vmem [#allocation2], %s154
        %p156 = pneg %p62
        %p157 = pneg %p59
        %p158 = pneg %p92
        %p159 = pneg %p89
        %s160 = sand.u32 %s79, 1
        %s161 = scalar_lea.sflag [#allocation4], %s160
        %s162 = sand.u32 %s79, 1
        %s163 = smul.addr %s162, 8
        %s164 = scalar_lea.vmem [#allocation5], %s163
        %s165 = smul.u32 4, %s23
        %s166 = smul.u32 4, %s23
        %v167 = vld [vmem:[%s146] sm:$0x3]
        %v168 = vld [vmem:[%s146 + $0x2] sm:$0x3]
        %v169 = vld [vmem:[%s146 + $0x4] sm:$0x3]
        %v170 = vld [vmem:[%s146 + $0x6] sm:$0x3]
        %171 = vst [vmem:[%s164] sm:$0x3] %v167
        %172 = vst [vmem:[%s164 + $0x2] sm:$0x3] %v168
        %173 = vst [vmem:[%s164 + $0x4] sm:$0x3] %v169
        %174 = vst [vmem:[%s164 + $0x6] sm:$0x3] %v170
        %s175 = sand.u32 %s79, 1
        %s176 = scalar_lea.sflag [#allocation4], %s175
        %s177 = sand.u32 %s79, 1
        %s178 = smul.addr %s177, 8
        %s179 = scalar_lea.vmem [#allocation5], %s178
        // Predicated region
        $region29: #{tpu_custom_call.1} parent=23 // pred_check
          %p180 = pneg %p89
        $region30: #{tpu_custom_call.1} parent=23 // pred_check_branch
          %182 = sbr.rel (%p180) target = $region32
        $region31: #{tpu_custom_call.1} parent=23 // pred_region
          %s183 = smul.u32 4, %s23
          %s185 = ssub.s32 128, 128
          %186 = vsyncadd %s176, %s185
          %s187 = sadd.s32 %s25, %s183
          %s188 = smul.addr %s24, 4
          %s189 = sadd.s32 %s187, %s188
          %s190 = smul.addr %s189, 32
          %s191 = scalar_lea.hbm %s1, %s190
          %s192 = sshll.u32 %s179, 4
          %s193 = int_to_ptr.vmem [resolvable:$true] %s192
          %198 = dma.vmem_to_hbm [thread:$0]  %s193, 128, %s191, %s176, 32, 32, 2
        $region32: #{tpu_custom_call.1} parent=23 // pred_fallthru
          _
      $region24: #{tpu_custom_call.1} parent=5 // pred_fallthru
        _
      %p199 = scmp.le.s32.totalorder 2, %s13
      // Predicated region
      $region33: #{tpu_custom_call.1} parent=5 // pred_check
        %p200 = pneg %p199
      $region34: #{tpu_custom_call.1} parent=5 // pred_check_branch
        %202 = sbr.rel (%p200) target = $region36
      $region35: #{tpu_custom_call.1} parent=5 // pred_region
        %s203 = ssub.s32 %s13, 2
        // Predicated region
        $region37: #{tpu_custom_call.1} parent=35 // pred_check
          %p204 = pneg %p95
        $region38: #{tpu_custom_call.1} parent=35 // pred_check_branch
          %206 = sbr.rel (%p204) target = $region40
        $region39: #{tpu_custom_call.1} parent=35 // pred_region
          %s207 = sand.u32 %s80, 1
          %s208 = scalar_lea.sflag [#allocation4], %s207
          %s209 = sand.u32 %s80, 1
          %s210 = smul.addr %s209, 8
          %s211 = scalar_lea.vmem [#allocation5], %s210
          %212 = dma.done %s208, 128
        $region40: #{tpu_custom_call.1} parent=35 // pred_fallthru
          _
      $region36: #{tpu_custom_call.1} parent=5 // pred_fallthru
        _
    $region6: #{tpu_custom_call.1} parent=1 // loop_footer
      %s17 = sadd.s32 1, %s13
    $region7: #{tpu_custom_call.1} parent=1 // loop_footer_branch
      %12 = sbr.rel target = $region3
    $region8: #{tpu_custom_call.1} parent=1 // loop_exit
      _
    %213 = vsyncpa [#allocation3], 1
    %s214 = scalar_lea.sflag [#allocation3], 1
    %215 = vsyncpa %s214, 1
    %216 = vsyncpa [#allocation4], 1
    %s217 = scalar_lea.sflag [#allocation4], 1
    %218 = vsyncpa %s217, 1

</llo_original>
